<compile_context>
chip_gen: v7x
topology: tpu7x:2x2x1
jax: 0.10.0
libtpu: 0.0.40
codegen_flags: <defaults>
</compile_context>

<pallas_src>
import jax
import jax.numpy as jnp
from jax.experimental import pallas as pl
from jax.experimental.pallas import tpu as pltpu


# ----------------------------------------------------------------------- kernels

def _head(c, w1_ref, b1_ref, w2_ref, b2_ref, o_ref):
    """One conditioning head: Linear -> SiLU -> Linear (f32 accumulate / activation)."""
    h = jnp.dot(c, w1_ref[...], preferred_element_type=jnp.float32) + b1_ref[...]
    h = h * jax.nn.sigmoid(h)                               # SiLU in f32 (exp on EUP)
    y = jnp.dot(h.astype(w2_ref.dtype), w2_ref[...],
                preferred_element_type=jnp.float32) + b2_ref[...]
    o_ref[...] = y.astype(o_ref.dtype)


def cond_net_kernel_pos_scale(c_ref, w1p_ref, b1p_ref, w2p_ref, b2p_ref,
                              w1s_ref, b1s_ref, w2s_ref, b2s_ref,
                              pos_ref, scl_ref):
    c = c_ref[...]
    _head(c, w1p_ref, b1p_ref, w2p_ref, b2p_ref, pos_ref)
    _head(c, w1s_ref, b1s_ref, w2s_ref, b2s_ref, scl_ref)


def cond_net_kernel_pos(c_ref, w1p_ref, b1p_ref, w2p_ref, b2p_ref, pos_ref):
    _head(c_ref[...], w1p_ref, b1p_ref, w2p_ref, b2p_ref, pos_ref)


# ----------------------------------------------------------------------- helpers

def _round_up(x, m):
    return ((x + m - 1) // m) * m


def _vmem_budget_bytes():
    """Per-generation budget for double-buffered pipeline state (with headroom)."""
    try:
        cap = int(pltpu.get_tpu_info().vmem_capacity_bytes)
    except Exception:
        cap = 64 << 20                       # v7x-sized conservative fallback
    return max(8 << 20, min(cap // 4, 24 << 20))


def _pick_batch_tile(nb, row_in_bytes, row_out_bytes, budget_bytes, max_tile):
    """Largest sublane-aligned batch tile whose double-buffered in+out tiles fit budget."""
    nb8 = _round_up(max(nb, 1), 8)
    tb = min(_round_up(max_tile, 8), nb8)
    per_row = 2 * (row_in_bytes + row_out_bytes)   # double-buffered input + outputs
    while tb > 8 and tb * per_row > budget_bytes:
        tb = _round_up(tb // 2, 8)
    # Whole batch fits a single tile: split into two balanced grid steps so a
    # dual-TC chip (v7x) can shard the "parallel" axis across both TensorCores.
    if nb8 <= tb and nb8 >= 16:
        tb = _round_up(pl.cdiv(nb8, 2), 8)
    return tb


def init_cond_net_params(key, dim_c, d_model, hidden=32):
    """Deterministic synthetic params (PyTorch-Linear-like uniform init)."""
    ks = jax.random.split(key, 8)

    def lin(kw, kb, fan_in, fan_out):
        bound = 1.0 / jnp.sqrt(jnp.float32(fan_in))
        w = jax.random.uniform(kw, (fan_in, fan_out), jnp.float32, -bound, bound)
        b = jax.random.uniform(kb, (1, fan_out), jnp.float32, -bound, bound)
        return w, b

    w1p, b1p = lin(ks[0], ks[1], dim_c, hidden)
    w2p, b2p = lin(ks[2], ks[3], hidden, d_model)
    w1s, b1s = lin(ks[4], ks[5], dim_c, hidden)
    w2s, b2s = lin(ks[6], ks[7], hidden, d_model)
    return dict(w1p=w1p, b1p=b1p, w2p=w2p, b2p=b2p,
                w1s=w1s, b1s=b1s, w2s=w2s, b2s=b2s)


# ----------------------------------------------------------------------- forward

def cond_net_forward(c_in, params, dim_x0, dim_x1, dim_x2, scale=True,
                     out_dtype=jnp.float32, use_bf16=False, max_batch_tile=1024):
    """Pallas forward for Cond_Net (len(dim_x0) == 1, so no Mixer3D stages)."""
    nb, dim_c = c_in.shape
    d0, d1, d2 = dim_x0[0], dim_x1[0], dim_x2[0]
    d_model = d0 * d1 * d2
    hidden = params["w1p"].shape[1]
    n_heads = 2 if scale else 1

    compute_dtype = jnp.bfloat16 if use_bf16 else jnp.float32
    in_bytes = jnp.dtype(compute_dtype).itemsize
    out_bytes = jnp.dtype(out_dtype).itemsize

    # Batch tiling against a per-chip VMEM budget; weights stay resident.
    budget = _vmem_budget_bytes()
    row_in = dim_c * in_bytes
    row_out = n_heads * d_model * out_bytes
    tb = _pick_batch_tile(nb, row_in, row_out, budget, max_batch_tile)
    nb_pad = _round_up(nb, tb)
    grid = (nb_pad // tb,)

    c_p = c_in.astype(compute_dtype)
    if nb_pad != nb:
        c_p = jnp.pad(c_p, ((0, nb_pad - nb), (0, 0)))

    def wcast(name):
        return params[name].astype(compute_dtype)

    # Biases stay f32: the bias-add happens on the f32 accumulator.
    weight_args = [wcast("w1p"), params["b1p"], wcast("w2p"), params["b2p"]]
    if scale:
        weight_args += [wcast("w1s"), params["b1s"], wcast("w2s"), params["b2s"]]

    head_specs = [
        pl.BlockSpec((dim_c, hidden), lambda i: (0, 0)),     # w1 (resident in VMEM)
        pl.BlockSpec((1, hidden), lambda i: (0, 0)),         # b1
        pl.BlockSpec((hidden, d_model), lambda i: (0, 0)),   # w2
        pl.BlockSpec((1, d_model), lambda i: (0, 0)),        # b2
    ]
    in_specs = [pl.BlockSpec((tb, dim_c), lambda i: (i, 0))] + head_specs * n_heads

    out_block = pl.BlockSpec((tb, d_model), lambda i: (i, 0))
    if scale:
        kernel = cond_net_kernel_pos_scale
        out_shape = (jax.ShapeDtypeStruct((nb_pad, d_model), out_dtype),
                     jax.ShapeDtypeStruct((nb_pad, d_model), out_dtype))
        out_specs = (out_block, out_block)
    else:
        kernel = cond_net_kernel_pos
        out_shape = jax.ShapeDtypeStruct((nb_pad, d_model), out_dtype)
        out_specs = out_block

    # Estimated VMEM footprint -> scoped-VMEM limit (kept in the 16..32 MiB range,
    # which is safe on v5e / v6e / v7x).
    weight_bytes = n_heads * (dim_c * hidden * in_bytes + hidden * 4
                              + hidden * d_model * in_bytes + d_model * 4)
    footprint = 2 * tb * (row_in + row_out) + weight_bytes
    vmem_limit = int(min(32 << 20, max(16 << 20, 2 * footprint)))

    result = pl.pallas_call(
        kernel,
        out_shape=out_shape,
        grid_spec=pltpu.PrefetchScalarGridSpec(
            num_scalar_prefetch=0,
            grid=grid,
            in_specs=in_specs,
            out_specs=out_specs,
        ),
        compiler_params=pltpu.CompilerParams(
            dimension_semantics=("parallel",),
            vmem_limit_bytes=vmem_limit,
        ),
    )(c_p, *weight_args)

    # No Mixer3D stages: len(dim_x0) == 1 -> pos_mixer / scale_mixer are empty.
    if scale:
        pos_flat, scl_flat = result
        pos_emb = pos_flat[:nb].reshape(nb, d0, d1, d2)
        scale_emb = scl_flat[:nb].reshape(nb, d0, d1, d2)
        return pos_emb, scale_emb
    return result[:nb].reshape(nb, d0, d1, d2)


# ----------------------------------------------------------------------- reference

def cond_net_reference(c_in, params, dim_x0, dim_x1, dim_x2):
    """Pure-JAX f32 reference using the original (unfused) parameters."""
    nb = c_in.shape[0]
    d0, d1, d2 = dim_x0[0], dim_x1[0], dim_x2[0]

    def silu(x):
        return x * jax.nn.sigmoid(x)

    h = silu(c_in @ params["w1p"] + params["b1p"])
    pos = (h @ params["w2p"] + params["b2p"]).reshape(nb, d0, d1, d2)
    h = silu(c_in @ params["w1s"] + params["b1s"])
    scl = (h @ params["w2s"] + params["b2s"]).reshape(nb, d0, d1, d2)
    return pos, scl


# ----------------------------------------------------------------------- main

if __name__ == "__main__":
    dim_x0 = [4]    # d0
    dim_x1 = [8]    # d1
    dim_x2 = [16]   # d2
    dim_c = 8       # conditioning dim
    d_model = dim_x0[0] * dim_x1[0] * dim_x2[0]   # 512

    key = jax.random.PRNGKey(0)
    k_params, k_in1, k_in2 = jax.random.split(key, 3)
    params = init_cond_net_params(k_params, dim_c, d_model)

    # Case 1: tiny batch, f32, both heads (exact path, 1e-5 parity).
    batch = 2
    c1 = jax.random.normal(k_in1, (batch, dim_c), jnp.float32)
    pos1, scl1 = cond_net_forward(c1, params, dim_x0, dim_x1, dim_x2, scale=True)
    jax.block_until_ready((pos1, scl1))
    pos1_ref, scl1_ref = cond_net_reference(c1, params, dim_x0, dim_x1, dim_x2)
    assert pos1.shape == (batch, dim_x0[0], dim_x1[0], dim_x2[0])
    assert scl1.shape == (batch, dim_x0[0], dim_x1[0], dim_x2[0])
    assert jnp.allclose(pos1, pos1_ref, atol=1e-5, rtol=1e-5)
    assert jnp.allclose(scl1, scl1_ref, atol=1e-5, rtol=1e-5)

    # Case 2: multi-tile grid + batch-padding path (grid = (3,)), f32.
    batch2 = 40
    c2 = jax.random.normal(k_in2, (batch2, dim_c), jnp.float32)
    pos2, scl2 = cond_net_forward(c2, params, dim_x0, dim_x1, dim_x2,
                                  scale=True, max_batch_tile=16)
    jax.block_until_ready((pos2, scl2))
    pos2_ref, scl2_ref = cond_net_reference(c2, params, dim_x0, dim_x1, dim_x2)
    assert jnp.allclose(pos2, pos2_ref, atol=1e-5, rtol=1e-5)
    assert jnp.allclose(scl2, scl2_ref, atol=1e-5, rtol=1e-5)

    # Case 3: scale=False -> pos-only kernel (half the work / HBM traffic).
    pos3 = cond_net_forward(c2, params, dim_x0, dim_x1, dim_x2, scale=False)
    jax.block_until_ready(pos3)
    assert jnp.allclose(pos3, pos2_ref, atol=1e-5, rtol=1e-5)

    # Case 4: bf16 MXU operands + bf16 output (perf path; looser tolerance).
    pos4, scl4 = cond_net_forward(c2, params, dim_x0, dim_x1, dim_x2, scale=True,
                                  use_bf16=True, out_dtype=jnp.bfloat16)
    jax.block_until_ready((pos4, scl4))
    assert pos4.dtype == jnp.bfloat16 and scl4.dtype == jnp.bfloat16
    assert jnp.allclose(pos4.astype(jnp.float32), pos2_ref, atol=5e-2, rtol=5e-2)
    assert jnp.allclose(scl4.astype(jnp.float32), scl2_ref, atol=5e-2, rtol=5e-2)

    print("KERNEL_OK")
</pallas_src>

<mosaic_0001>
module attributes {stable_mosaic.version = 11 : i64} {
  func.func @cond_net_kernel_pos_scale(%arg0: i32, %arg1: memref<8x8xf32, #tpu.memory_space<vmem>>, %arg2: memref<8x32xf32, #tpu.memory_space<vmem>>, %arg3: memref<1x32xf32, #tpu.memory_space<vmem>>, %arg4: memref<32x512xf32, #tpu.memory_space<vmem>>, %arg5: memref<1x512xf32, #tpu.memory_space<vmem>>, %arg6: memref<8x32xf32, #tpu.memory_space<vmem>>, %arg7: memref<1x32xf32, #tpu.memory_space<vmem>>, %arg8: memref<32x512xf32, #tpu.memory_space<vmem>>, %arg9: memref<1x512xf32, #tpu.memory_space<vmem>>, %arg10: memref<8x512xf32, #tpu.memory_space<vmem>>, %arg11: memref<8x512xf32, #tpu.memory_space<vmem>>) attributes {dimension_semantics = [#tpu.dimension_semantics<parallel>], iteration_bounds = array<i64: 1>, scalar_prefetch = 0 : i64, scratch_operands = 0 : i64, tpu.core_type = #tpu.core_type<tc>, window_params = [{transform_indices = @transform_0, window_bounds = array<i64: 8, 8>}, {pipeline_mode = #tpu.pipeline_mode<synchronous>, transform_indices = @transform_1, window_bounds = array<i64: 8, 32>}, {pipeline_mode = #tpu.pipeline_mode<synchronous>, transform_indices = @transform_2, window_bounds = array<i64: 1, 32>}, {pipeline_mode = #tpu.pipeline_mode<synchronous>, transform_indices = @transform_3, window_bounds = array<i64: 32, 512>}, {pipeline_mode = #tpu.pipeline_mode<synchronous>, transform_indices = @transform_4, window_bounds = array<i64: 1, 512>}, {pipeline_mode = #tpu.pipeline_mode<synchronous>, transform_indices = @transform_5, window_bounds = array<i64: 8, 32>}, {pipeline_mode = #tpu.pipeline_mode<synchronous>, transform_indices = @transform_6, window_bounds = array<i64: 1, 32>}, {pipeline_mode = #tpu.pipeline_mode<synchronous>, transform_indices = @transform_7, window_bounds = array<i64: 32, 512>}, {pipeline_mode = #tpu.pipeline_mode<synchronous>, transform_indices = @transform_8, window_bounds = array<i64: 1, 512>}, {transform_indices = @transform_9, window_bounds = array<i64: 8, 512>}, {transform_indices = @transform_10, window_bounds = array<i64: 8, 512>}]} {
    %c0 = arith.constant 0 : index
    %c0_0 = arith.constant 0 : index
    %0 = vector.load %arg1[%c0, %c0_0] : memref<8x8xf32, #tpu.memory_space<vmem>>, vector<8x8xf32>
    %c0_1 = arith.constant 0 : index
    %c0_2 = arith.constant 0 : index
    %1 = vector.load %arg2[%c0_1, %c0_2] : memref<8x32xf32, #tpu.memory_space<vmem>>, vector<8x32xf32>
    %cst = arith.constant dense<0.000000e+00> : vector<8x32xf32>
    %2 = tpu.matmul %0, %1, %cst {dimension_numbers = #tpu.dot_dimension_numbers<[1], [0], [0], [1], [0, 0, 1, 1], [], []>} : vector<8x8xf32>, vector<8x32xf32>, vector<8x32xf32> -> vector<8x32xf32>
    %c0_3 = arith.constant 0 : index
    %c0_4 = arith.constant 0 : index
    %3 = vector.load %arg3[%c0_3, %c0_4] : memref<1x32xf32, #tpu.memory_space<vmem>>, vector<1x32xf32>
    %4 = vector.broadcast %3 : vector<1x32xf32> to vector<8x32xf32>
    %5 = arith.addf %2, %4 : vector<8x32xf32>
    %6 = arith.negf %5 : vector<8x32xf32>
    %7 = math.exp %6 : vector<8x32xf32>
    %cst_5 = arith.constant 1.000000e+00 : f32
    %8 = vector.broadcast %cst_5 : f32 to vector<8x32xf32>
    %9 = arith.addf %8, %7 : vector<8x32xf32>
    %10 = arith.divf %8, %9 : vector<8x32xf32>
    %11 = arith.mulf %5, %10 : vector<8x32xf32>
    %c0_6 = arith.constant 0 : index
    %c0_7 = arith.constant 0 : index
    %12 = vector.load %arg4[%c0_6, %c0_7] : memref<32x512xf32, #tpu.memory_space<vmem>>, vector<32x512xf32>
    %cst_8 = arith.constant dense<0.000000e+00> : vector<8x512xf32>
    %13 = tpu.matmul %11, %12, %cst_8 {dimension_numbers = #tpu.dot_dimension_numbers<[1], [0], [0], [1], [0, 0, 1, 1], [], []>} : vector<8x32xf32>, vector<32x512xf32>, vector<8x512xf32> -> vector<8x512xf32>
    %c0_9 = arith.constant 0 : index
    %c0_10 = arith.constant 0 : index
    %14 = vector.load %arg5[%c0_9, %c0_10] : memref<1x512xf32, #tpu.memory_space<vmem>>, vector<1x512xf32>
    %15 = vector.broadcast %14 : vector<1x512xf32> to vector<8x512xf32>
    %16 = arith.addf %13, %15 : vector<8x512xf32>
    %c0_11 = arith.constant 0 : index
    %c0_12 = arith.constant 0 : index
    %17 = vector.load %arg10[%c0_11, %c0_12] : memref<8x512xf32, #tpu.memory_space<vmem>>, vector<8x512xf32>
    tpu.vector_store %arg10[%c0_11, %c0_12], %16 {strides = array<i32>} : memref<8x512xf32, #tpu.memory_space<vmem>>, vector<8x512xf32>,
    %c0_13 = arith.constant 0 : index
    %c0_14 = arith.constant 0 : index
    %18 = vector.load %arg6[%c0_13, %c0_14] : memref<8x32xf32, #tpu.memory_space<vmem>>, vector<8x32xf32>
    %cst_15 = arith.constant dense<0.000000e+00> : vector<8x32xf32>
    %19 = tpu.matmul %0, %18, %cst_15 {dimension_numbers = #tpu.dot_dimension_numbers<[1], [0], [0], [1], [0, 0, 1, 1], [], []>} : vector<8x8xf32>, vector<8x32xf32>, vector<8x32xf32> -> vector<8x32xf32>
    %c0_16 = arith.constant 0 : index
    %c0_17 = arith.constant 0 : index
    %20 = vector.load %arg7[%c0_16, %c0_17] : memref<1x32xf32, #tpu.memory_space<vmem>>, vector<1x32xf32>
    %21 = vector.broadcast %20 : vector<1x32xf32> to vector<8x32xf32>
    %22 = arith.addf %19, %21 : vector<8x32xf32>
    %23 = arith.negf %22 : vector<8x32xf32>
    %24 = math.exp %23 : vector<8x32xf32>
    %cst_18 = arith.constant 1.000000e+00 : f32
    %25 = vector.broadcast %cst_18 : f32 to vector<8x32xf32>
    %26 = arith.addf %25, %24 : vector<8x32xf32>
    %27 = arith.divf %25, %26 : vector<8x32xf32>
    %28 = arith.mulf %22, %27 : vector<8x32xf32>
    %c0_19 = arith.constant 0 : index
    %c0_20 = arith.constant 0 : index
    %29 = vector.load %arg8[%c0_19, %c0_20] : memref<32x512xf32, #tpu.memory_space<vmem>>, vector<32x512xf32>
    %cst_21 = arith.constant dense<0.000000e+00> : vector<8x512xf32>
    %30 = tpu.matmul %28, %29, %cst_21 {dimension_numbers = #tpu.dot_dimension_numbers<[1], [0], [0], [1], [0, 0, 1, 1], [], []>} : vector<8x32xf32>, vector<32x512xf32>, vector<8x512xf32> -> vector<8x512xf32>
    %c0_22 = arith.constant 0 : index
    %c0_23 = arith.constant 0 : index
    %31 = vector.load %arg9[%c0_22, %c0_23] : memref<1x512xf32, #tpu.memory_space<vmem>>, vector<1x512xf32>
    %32 = vector.broadcast %31 : vector<1x512xf32> to vector<8x512xf32>
    %33 = arith.addf %30, %32 : vector<8x512xf32>
    %c0_24 = arith.constant 0 : index
    %c0_25 = arith.constant 0 : index
    %34 = vector.load %arg11[%c0_24, %c0_25] : memref<8x512xf32, #tpu.memory_space<vmem>>, vector<8x512xf32>
    tpu.vector_store %arg11[%c0_24, %c0_25], %33 {strides = array<i32>} : memref<8x512xf32, #tpu.memory_space<vmem>>, vector<8x512xf32>,
    return
  }
  func.func @transform_0(%arg0: i32) -> (i32, i32) {
    %c0_i32 = arith.constant 0 : i32
    %c0_i32_0 = arith.constant 0 : i32
    return %arg0, %c0_i32 : i32, i32
  }
  func.func @transform_1(%arg0: i32) -> (i32, i32) {
    %c0_i32 = arith.constant 0 : i32
    %c0_i32_0 = arith.constant 0 : i32
    %c0_i32_1 = arith.constant 0 : i32
    return %c0_i32, %c0_i32_0 : i32, i32
  }
  func.func @transform_2(%arg0: i32) -> (i32, i32) {
    %c0_i32 = arith.constant 0 : i32
    %c0_i32_0 = arith.constant 0 : i32
    %c0_i32_1 = arith.constant 0 : i32
    return %c0_i32, %c0_i32_0 : i32, i32
  }
  func.func @transform_3(%arg0: i32) -> (i32, i32) {
    %c0_i32 = arith.constant 0 : i32
    %c0_i32_0 = arith.constant 0 : i32
    %c0_i32_1 = arith.constant 0 : i32
    return %c0_i32, %c0_i32_0 : i32, i32
  }
  func.func @transform_4(%arg0: i32) -> (i32, i32) {
    %c0_i32 = arith.constant 0 : i32
    %c0_i32_0 = arith.constant 0 : i32
    %c0_i32_1 = arith.constant 0 : i32
    return %c0_i32, %c0_i32_0 : i32, i32
  }
  func.func @transform_5(%arg0: i32) -> (i32, i32) {
    %c0_i32 = arith.constant 0 : i32
    %c0_i32_0 = arith.constant 0 : i32
    %c0_i32_1 = arith.constant 0 : i32
    return %c0_i32, %c0_i32_0 : i32, i32
  }
  func.func @transform_6(%arg0: i32) -> (i32, i32) {
    %c0_i32 = arith.constant 0 : i32
    %c0_i32_0 = arith.constant 0 : i32
    %c0_i32_1 = arith.constant 0 : i32
    return %c0_i32, %c0_i32_0 : i32, i32
  }
  func.func @transform_7(%arg0: i32) -> (i32, i32) {
    %c0_i32 = arith.constant 0 : i32
    %c0_i32_0 = arith.constant 0 : i32
    %c0_i32_1 = arith.constant 0 : i32
    return %c0_i32, %c0_i32_0 : i32, i32
  }
  func.func @transform_8(%arg0: i32) -> (i32, i32) {
    %c0_i32 = arith.constant 0 : i32
    %c0_i32_0 = arith.constant 0 : i32
    %c0_i32_1 = arith.constant 0 : i32
    return %c0_i32, %c0_i32_0 : i32, i32
  }
  func.func @transform_9(%arg0: i32) -> (i32, i32) {
    %c0_i32 = arith.constant 0 : i32
    %c0_i32_0 = arith.constant 0 : i32
    return %arg0, %c0_i32 : i32, i32
  }
  func.func @transform_10(%arg0: i32) -> (i32, i32) {
    %c0_i32 = arith.constant 0 : i32
    %c0_i32_0 = arith.constant 0 : i32
    return %arg0, %c0_i32 : i32, i32
  }
}

</mosaic_0001>

<llo_original>
// kernel: tpu_custom_call.1
$region0: #{tpu_custom_call.1}
  #allocation0 [shape = 'u32[]', space=smem, size = 0x4, offset = 0x4, fixed_abs, tag = 'smem constant byte address 0x4 - core index']
  #allocation1 [shape = 'u32[144,128]{1,0:T(1,128)}', space=vmem, size = 0x12000, scoped, tag = 'internal scratch']
  %s0 = inlined_call_operand.hbm [shape: f32[8,8], index: 0, kind: input, shape index: {}]
  %s1 = inlined_call_operand.hbm [shape: f32[8,32], index: 1, kind: input, shape index: {}]
  %s2 = inlined_call_operand.vmem [shape: f32[1,32], index: 2, kind: input, shape index: {}]
  %s3 = inlined_call_operand.hbm [shape: f32[32,512], index: 3, kind: input, shape index: {}]
  %s4 = inlined_call_operand.vmem [shape: f32[1,512], index: 4, kind: input, shape index: {}]
  %s5 = inlined_call_operand.vmem [shape: f32[8,32], index: 5, kind: input, shape index: {}]
  %s6 = inlined_call_operand.vmem [shape: f32[1,32], index: 6, kind: input, shape index: {}]
  %s7 = inlined_call_operand.hbm [shape: f32[32,512], index: 7, kind: input, shape index: {}]
  %s8 = inlined_call_operand.vmem [shape: f32[1,512], index: 8, kind: input, shape index: {}]
  %s9 = inlined_call_operand.hbm [shape: f32[8,512], index: 9, kind: output, shape index: {0}]
  %s10 = inlined_call_operand.hbm [shape: f32[8,512], index: 10, kind: output, shape index: {1}]
  %11 = xla_tuple %s9, %s10
  %s12 = sld [smem:[#allocation0]]
  $region70: #{tpu_custom_call.1} parent=0
    _
  %s14 = ssub.s32 1, %s12
  %s15 = scalar_select 0, %s14, %s12
  $region1: #{tpu_custom_call.1} parent=0
    #allocation2 [shape = 'u8[4096]{0}', space=vmem, size = 0x1000, scoped, tag = 'input window, operand 0, single buffered']
    #allocation3 [shape = 's32[1]{0}', space=sflag, size = 0x4, scoped, tag = 'scoped memory for tpu_custom_call.1']
    #allocation4 [shape = 's32[1]{0}', space=sflag, size = 0x4, scoped, tag = 'scoped memory for tpu_custom_call.1']
    #allocation5 [shape = 'u8[4096]{0}', space=vmem, size = 0x1000, scoped, tag = 'input window, operand 1, single buffered']
    #allocation6 [shape = 's32[1]{0}', space=sflag, size = 0x4, scoped, tag = 'scoped memory for tpu_custom_call.1']
    #allocation7 [shape = 'u8[65536]{0}', space=vmem, size = 0x10000, scoped, tag = 'input window, operand 3, single buffered']
    #allocation8 [shape = 'u8[65536]{0}', space=vmem, size = 0x10000, scoped, tag = 'input window, operand 7, single buffered']
    #allocation9 [shape = 's32[1]{0}', space=sflag, size = 0x4, scoped, tag = 'scoped memory for tpu_custom_call.1']
    #allocation10 [shape = 'u8[16384]{0}', space=vmem, size = 0x4000, scoped, tag = 'output window, operand 0, single buffered']
    #allocation11 [shape = 'u8[16384]{0}', space=vmem, size = 0x4000, scoped, tag = 'output window, operand 1, single buffered']
    #allocation12 [shape = 's32[1]{0}', space=sflag, size = 0x4, scoped, tag = 'scoped memory for tpu_custom_call.1']
    %16 = vsyncpa [#allocation3], 0
    %17 = vsyncpa [#allocation6], 0
    %18 = vsyncpa [#allocation9], 0
    %19 = vsyncpa [#allocation4], 0
    %20 = vsyncpa [#allocation12], 0
    // Predicated region
    $region2: #{tpu_custom_call.1} parent=1 // pred_check
      _
    $region3: #{tpu_custom_call.1} parent=1 // pred_check_branch
      %22 = sbr.rel (0) target = $region5
    $region4: #{tpu_custom_call.1} parent=1 // pred_region
      %s24 = ssub.s32 128, 128
      %25 = vsyncadd [#allocation3], %s24
      %s27 = sshll.u32 [#allocation2], 4
      %s28 = int_to_ptr.vmem [resolvable:$true] %s27
      %30 = dma.hbm_to_vmem [thread:$0]  %s0, 128, %s28, [#allocation3]
    $region5: #{tpu_custom_call.1} parent=1 // pred_fallthru
      _
    // Predicated region
    $region6: #{tpu_custom_call.1} parent=1 // pred_check
      _
    $region7: #{tpu_custom_call.1} parent=1 // pred_check_branch
      %32 = sbr.rel (0) target = $region9
    $region8: #{tpu_custom_call.1} parent=1 // pred_region
      %s34 = ssub.s32 128, 128
      %35 = vsyncadd [#allocation6], %s34
      %s37 = sshll.u32 [#allocation5], 4
      %s38 = int_to_ptr.vmem [resolvable:$true] %s37
      %40 = dma.hbm_to_vmem [thread:$0]  %s1, 128, %s38, [#allocation6]
    $region9: #{tpu_custom_call.1} parent=1 // pred_fallthru
      _
    // Predicated region
    $region10: #{tpu_custom_call.1} parent=1 // pred_check
      _
    $region11: #{tpu_custom_call.1} parent=1 // pred_check_branch
      %42 = sbr.rel (0) target = $region13
    $region12: #{tpu_custom_call.1} parent=1 // pred_region
      _
    $region13: #{tpu_custom_call.1} parent=1 // pred_fallthru
      _
    // Predicated region
    $region14: #{tpu_custom_call.1} parent=1 // pred_check
      _
    $region15: #{tpu_custom_call.1} parent=1 // pred_check_branch
      %44 = sbr.rel (0) target = $region17
    $region16: #{tpu_custom_call.1} parent=1 // pred_region
      %s46 = ssub.s32 2048, 2048
      %47 = vsyncadd [#allocation6], %s46
      %s48 = sshll.u32 [#allocation7], 4
      %s49 = int_to_ptr.vmem [resolvable:$true] %s48
      %54 = dma.hbm_to_vmem [thread:$0]  %s3, 2048, %s49, [#allocation6], 512, 512, 32
    $region17: #{tpu_custom_call.1} parent=1 // pred_fallthru
      _
    // Predicated region
    $region18: #{tpu_custom_call.1} parent=1 // pred_check
      _
    $region19: #{tpu_custom_call.1} parent=1 // pred_check_branch
      %56 = sbr.rel (0) target = $region21
    $region20: #{tpu_custom_call.1} parent=1 // pred_region
      _
    $region21: #{tpu_custom_call.1} parent=1 // pred_fallthru
      _
    // Predicated region
    $region22: #{tpu_custom_call.1} parent=1 // pred_check
      _
    $region23: #{tpu_custom_call.1} parent=1 // pred_check_branch
      %58 = sbr.rel (0) target = $region25
    $region24: #{tpu_custom_call.1} parent=1 // pred_region
      _
    $region25: #{tpu_custom_call.1} parent=1 // pred_fallthru
      _
    // Predicated region
    $region26: #{tpu_custom_call.1} parent=1 // pred_check
      _
    $region27: #{tpu_custom_call.1} parent=1 // pred_check_branch
      %60 = sbr.rel (0) target = $region29
    $region28: #{tpu_custom_call.1} parent=1 // pred_region
      _
    $region29: #{tpu_custom_call.1} parent=1 // pred_fallthru
      _
    // Predicated region
    $region30: #{tpu_custom_call.1} parent=1 // pred_check
      _
    $region31: #{tpu_custom_call.1} parent=1 // pred_check_branch
      %62 = sbr.rel (0) target = $region33
    $region32: #{tpu_custom_call.1} parent=1 // pred_region
      %s64 = ssub.s32 2048, 2048
      %65 = vsyncadd [#allocation9], %s64
      %s66 = sshll.u32 [#allocation8], 4
      %s67 = int_to_ptr.vmem [resolvable:$true] %s66
      %72 = dma.hbm_to_vmem [thread:$0]  %s7, 2048, %s67, [#allocation9], 512, 512, 32
    $region33: #{tpu_custom_call.1} parent=1 // pred_fallthru
      _
    // Predicated region
    $region34: #{tpu_custom_call.1} parent=1 // pred_check
      _
    $region35: #{tpu_custom_call.1} parent=1 // pred_check_branch
      %74 = sbr.rel (0) target = $region37
    $region36: #{tpu_custom_call.1} parent=1 // pred_region
      _
    $region37: #{tpu_custom_call.1} parent=1 // pred_fallthru
      _
    // Predicated region
    $region38: #{tpu_custom_call.1} parent=1 // pred_check
      _
    $region39: #{tpu_custom_call.1} parent=1 // pred_check_branch
      %76 = sbr.rel (0) target = $region41
    $region40: #{tpu_custom_call.1} parent=1 // pred_region
      %77 = dma.done [#allocation3], 128
    $region41: #{tpu_custom_call.1} parent=1 // pred_fallthru
      _
    // Predicated region
    $region42: #{tpu_custom_call.1} parent=1 // pred_check
      _
    $region43: #{tpu_custom_call.1} parent=1 // pred_check_branch
      %79 = sbr.rel (0) target = $region45
    $region44: #{tpu_custom_call.1} parent=1 // pred_region
      %80 = dma.done [#allocation6], 128
    $region45: #{tpu_custom_call.1} parent=1 // pred_fallthru
      _
    // Predicated region
    $region46: #{tpu_custom_call.1} parent=1 // pred_check
      _
    $region47: #{tpu_custom_call.1} parent=1 // pred_check_branch
      %82 = sbr.rel (0) target = $region49
    $region48: #{tpu_custom_call.1} parent=1 // pred_region
      %83 = dma.done [#allocation6], 2048
    $region49: #{tpu_custom_call.1} parent=1 // pred_fallthru
      _
    // Predicated region
    $region50: #{tpu_custom_call.1} parent=1 // pred_check
      _
    $region51: #{tpu_custom_call.1} parent=1 // pred_check_branch
      %85 = sbr.rel (0) target = $region53
    $region52: #{tpu_custom_call.1} parent=1 // pred_region
      %86 = dma.done [#allocation9], 2048
    $region53: #{tpu_custom_call.1} parent=1 // pred_fallthru
      _
    %v87 = vld [vmem:[#allocation2] sm:$0xff]
    %v88 = vld [vmem:[#allocation5] sm:$0xff]
    %v89 = vld [vmem:[%s2] sm:$0x1]
    %v91 = vlaneseq
    %v92 = vshrl.u32 %v91, 7
    %v93 = vsub.s32 0, %v92
    %v94 = vrot.slane %v89, %v93
    %vm96 = vcmask 64512
    %v98 = vsel %vm96, %v87, 0
    %100 = vmatprep.subr.mxu0 0.0
    %101 = vmatpush1.msra.mxu0 %v88
    %102 = vmatprep.subr.mxu0 0.0
    %103 = vmatpush1.msra.mxu0 0.0
    %104 = vmatprep.subr.mxu0 0.0
    %105 = vmatpush1.msra.mxu0 0.0
    %106 = vmatprep.subr.mxu0 0.0
    %107 = vmatpush1.msra.mxu0 0.0
    %108 = vmatprep.subr.mxu0 0.0
    %109 = vmatpush1.msra.mxu0 0.0
    %110 = vmatprep.subr.mxu0 0.0
    %111 = vmatpush1.msra.mxu0 0.0
    %112 = vmatprep.subr.mxu0 0.0
    %113 = vmatpush1.msra.mxu0 0.0
    %114 = vmatprep.subr.mxu0 0.0
    %115 = vmatpush1.msra.mxu0 0.0
    %116 = vmatprep.subr.mxu0 0.0
    %117 = vmatpush1.msra.mxu0 0.0
    %118 = vmatprep.subr.mxu0 0.0
    %119 = vmatpush1.msra.mxu0 0.0
    %120 = vmatprep.subr.mxu0 0.0
    %121 = vmatpush1.msra.mxu0 0.0
    %122 = vmatprep.subr.mxu0 0.0
    %123 = vmatpush1.msra.mxu0 0.0
    %124 = vmatprep.subr.mxu0 0.0
    %125 = vmatpush1.msra.mxu0 0.0
    %126 = vmatprep.subr.mxu0 0.0
    %127 = vmatpush1.msra.mxu0 0.0
    %128 = vmatprep.subr.mxu0 0.0
    %129 = vmatpush1.msra.mxu0 0.0
    %130 = vmatprep.subr.mxu0 0.0
    %131 = vmatpush1.msra.mxu0 0.0
    %132 = vmatprep.subr.mxu0 0.0
    %133 = vmatpush1.msra.mxu0 0.0
    %134 = vmatprep.subr.mxu0 0.0
    %135 = vmatpush1.msra.mxu0 0.0
    %136 = vmatprep.subr.mxu0 0.0
    %137 = vmatpush1.msra.mxu0 0.0
    %138 = vmatprep.subr.mxu0 0.0
    %139 = vmatpush1.msra.mxu0 0.0
    %140 = vmatprep.subr.mxu0 0.0
    %141 = vmatpush1.msra.mxu0 0.0
    %142 = vmatprep.subr.mxu0 0.0
    %143 = vmatpush1.msra.mxu0 0.0
    %144 = vmatprep.subr.mxu0 0.0
    %145 = vmatpush1.msra.mxu0 0.0
    %146 = vmatprep.subr.mxu0 0.0
    %147 = vmatpush1.msra.mxu0 0.0
    %148 = vmatprep.subr.mxu0 0.0
    %149 = vmatpush1.msra.mxu0 0.0
    %150 = vmatprep.subr.mxu0 0.0
    %151 = vmatpush1.msra.mxu0 0.0
    %152 = vmatprep.subr.mxu0 0.0
    %153 = vmatpush1.msra.mxu0 0.0
    %154 = vmatprep.subr.mxu0 0.0
    %155 = vmatpush1.msra.mxu0 0.0
    %156 = vmatprep.subr.mxu0 0.0
    %157 = vmatpush1.msra.mxu0 0.0
    %158 = vmatprep.subr.mxu0 0.0
    %159 = vmatpush1.msra.mxu0 0.0
    %160 = vmatprep.subr.mxu0 0.0
    %161 = vmatpush1.msra.mxu0 0.0
    %162 = vmatprep.subr.mxu0 0.0
    %163 = vmatpush1.msra.mxu0 0.0
    %164 = vmatprep.mubr.f32.mxu0 0.0
    %165 = vmatmul.mubr.f32.gmra.mrb[0].mxu0 %v98
    %v166 = vpop.f32.mrb[0].mxu0
    %v167 = vadd.f32 %v94, %v166
    %v168 = vpop.f32.mrb[0].mxu0
    %169 = vdwg.mxu0
    %v170 = vxor.u32 %v167, 2147483648
    %v171 = vmul.f32 %v170, 1.442695
    %v172 = vpow.pop %v171
    %v173 = vadd.f32 %v172, 1.0
    %v174 = vrcp.pop %v173
    %v175 = vmul.f32 1.0, %v174
    %v176 = vmul.f32 %v167, %v175
    %v177 = vld [vmem:[#allocation7] sm:$0xff]
    %v178 = vld [vmem:[#allocation7 + $0x8] sm:$0xff]
    %v179 = vld [vmem:[#allocation7 + $0x10] sm:$0xff]
    %v180 = vld [vmem:[#allocation7 + $0x18] sm:$0xff]
    %v181 = vld [vmem:[#allocation7 + $0x20] sm:$0xff]
    %v182 = vld [vmem:[#allocation7 + $0x28] sm:$0xff]
    %v183 = vld [vmem:[#allocation7 + $0x30] sm:$0xff]
    %v184 = vld [vmem:[#allocation7 + $0x38] sm:$0xff]
    %v185 = vld [vmem:[#allocation7 + $0x40] sm:$0xff]
    %v186 = vld [vmem:[#allocation7 + $0x48] sm:$0xff]
    %v187 = vld [vmem:[#allocation7 + $0x50] sm:$0xff]
    %v188 = vld [vmem:[#allocation7 + $0x58] sm:$0xff]
    %v189 = vld [vmem:[#allocation7 + $0x60] sm:$0xff]
    %v190 = vld [vmem:[#allocation7 + $0x68] sm:$0xff]
    %v191 = vld [vmem:[#allocation7 + $0x70] sm:$0xff]
    %v192 = vld [vmem:[#allocation7 + $0x78] sm:$0xff]
    %v193 = vld [vmem:[%s4] sm:$0xf]
    %v195 = vlaneseq
    %v196 = vshrl.u32 %v195, 7
    %v197 = vsub.s32 0, %v196
    %v198 = vrot.slane %v193, %v197
    %v199 = vlaneseq
    %v200 = vshrl.u32 %v199, 7
    %v201 = vsub.s32 1, %v200
    %v202 = vrot.slane %v193, %v201
    %v203 = vlaneseq
    %v204 = vshrl.u32 %v203, 7
    %v205 = vsub.s32 2, %v204
    %v206 = vrot.slane %v193, %v205
    %v207 = vlaneseq
    %v208 = vshrl.u32 %v207, 7
    %v209 = vsub.s32 3, %v208
    %v210 = vrot.slane %v193, %v209
    %vm215 = vcmask 261120
    %v217 = vsel %vm215, %v176, 0
    %219 = vmatprep.subr.mxu0 %v178
    %220 = vmatpush1.msra.mxu0 %v177
    %221 = vmatprep.subr.mxu0 %v182
    %222 = vmatpush1.msra.mxu0 %v181
    %223 = vmatprep.subr.mxu0 %v186
    %224 = vmatpush1.msra.mxu0 %v185
    %225 = vmatprep.subr.mxu0 %v190
    %226 = vmatpush1.msra.mxu0 %v189
    %227 = vmatprep.subr.mxu0 0.0
    %228 = vmatpush1.msra.mxu0 0.0
    %229 = vmatprep.subr.mxu0 0.0
    %230 = vmatpush1.msra.mxu0 0.0
    %231 = vmatprep.subr.mxu0 0.0
    %232 = vmatpush1.msra.mxu0 0.0
    %233 = vmatprep.subr.mxu0 0.0
    %234 = vmatpush1.msra.mxu0 0.0
    %235 = vmatprep.subr.mxu0 0.0
    %236 = vmatpush1.msra.mxu0 0.0
    %237 = vmatprep.subr.mxu0 0.0
    %238 = vmatpush1.msra.mxu0 0.0
    %239 = vmatprep.subr.mxu0 0.0
    %240 = vmatpush1.msra.mxu0 0.0
    %241 = vmatprep.subr.mxu0 0.0
    %242 = vmatpush1.msra.mxu0 0.0
    %243 = vmatprep.subr.mxu0 0.0
    %244 = vmatpush1.msra.mxu0 0.0
    %245 = vmatprep.subr.mxu0 0.0
    %246 = vmatpush1.msra.mxu0 0.0
    %247 = vmatprep.subr.mxu0 0.0
    %248 = vmatpush1.msra.mxu0 0.0
    %249 = vmatprep.subr.mxu0 0.0
    %250 = vmatpush1.msra.mxu0 0.0
    %251 = vmatprep.subr.mxu0 0.0
    %252 = vmatpush1.msra.mxu0 0.0
    %253 = vmatprep.subr.mxu0 0.0
    %254 = vmatpush1.msra.mxu0 0.0
    %255 = vmatprep.subr.mxu0 0.0
    %256 = vmatpush1.msra.mxu0 0.0
    %257 = vmatprep.subr.mxu0 0.0
    %258 = vmatpush1.msra.mxu0 0.0
    %259 = vmatprep.subr.mxu0 0.0
    %260 = vmatpush1.msra.mxu0 0.0
    %261 = vmatprep.subr.mxu0 0.0
    %262 = vmatpush1.msra.mxu0 0.0
    %263 = vmatprep.subr.mxu0 0.0
    %264 = vmatpush1.msra.mxu0 0.0
    %265 = vmatprep.subr.mxu0 0.0
    %266 = vmatpush1.msra.mxu0 0.0
    %267 = vmatprep.subr.mxu0 0.0
    %268 = vmatpush1.msra.mxu0 0.0
    %269 = vmatprep.subr.mxu0 0.0
    %270 = vmatpush1.msra.mxu0 0.0
    %271 = vmatprep.subr.mxu0 0.0
    %272 = vmatpush1.msra.mxu0 0.0
    %273 = vmatprep.subr.mxu0 0.0
    %274 = vmatpush1.msra.mxu0 0.0
    %275 = vmatprep.subr.mxu0 0.0
    %276 = vmatpush1.msra.mxu0 0.0
    %277 = vmatprep.subr.mxu0 0.0
    %278 = vmatpush1.msra.mxu0 0.0
    %279 = vmatprep.subr.mxu0 0.0
    %280 = vmatpush1.msra.mxu0 0.0
    %281 = vmatprep.subr.mxu0 0.0
    %282 = vmatpush1.msra.mxu0 0.0
    %283 = vmatprep.mubr.f32.mxu0 0.0
    %284 = vmatmul.mubr.f32.gmra.mrb[0].mxu0 %v217
    %v285 = vpop.f32.mrb[0].mxu0
    %v286 = vadd.f32 %v198, %v285
    %v287 = vpop.f32.mrb[0].mxu0
    %v288 = vadd.f32 %v202, %v287
    %289 = vdwg.mxu0
    %290 = vmatprep.subr.mxu0 %v180
    %291 = vmatpush1.msra.mxu0 %v179
    %292 = vmatprep.subr.mxu0 %v184
    %293 = vmatpush1.msra.mxu0 %v183
    %294 = vmatprep.subr.mxu0 %v188
    %295 = vmatpush1.msra.mxu0 %v187
    %296 = vmatprep.subr.mxu0 %v192
    %297 = vmatpush1.msra.mxu0 %v191
    %298 = vmatprep.subr.mxu0 0.0
    %299 = vmatpush1.msra.mxu0 0.0
    %300 = vmatprep.subr.mxu0 0.0
    %301 = vmatpush1.msra.mxu0 0.0
    %302 = vmatprep.subr.mxu0 0.0
    %303 = vmatpush1.msra.mxu0 0.0
    %304 = vmatprep.subr.mxu0 0.0
    %305 = vmatpush1.msra.mxu0 0.0
    %306 = vmatprep.subr.mxu0 0.0
    %307 = vmatpush1.msra.mxu0 0.0
    %308 = vmatprep.subr.mxu0 0.0
    %309 = vmatpush1.msra.mxu0 0.0
    %310 = vmatprep.subr.mxu0 0.0
    %311 = vmatpush1.msra.mxu0 0.0
    %312 = vmatprep.subr.mxu0 0.0
    %313 = vmatpush1.msra.mxu0 0.0
    %314 = vmatprep.subr.mxu0 0.0
    %315 = vmatpush1.msra.mxu0 0.0
    %316 = vmatprep.subr.mxu0 0.0
    %317 = vmatpush1.msra.mxu0 0.0
    %318 = vmatprep.subr.mxu0 0.0
    %319 = vmatpush1.msra.mxu0 0.0
    %320 = vmatprep.subr.mxu0 0.0
    %321 = vmatpush1.msra.mxu0 0.0
    %322 = vmatprep.subr.mxu0 0.0
    %323 = vmatpush1.msra.mxu0 0.0
    %324 = vmatprep.subr.mxu0 0.0
    %325 = vmatpush1.msra.mxu0 0.0
    %326 = vmatprep.subr.mxu0 0.0
    %327 = vmatpush1.msra.mxu0 0.0
    %328 = vmatprep.subr.mxu0 0.0
    %329 = vmatpush1.msra.mxu0 0.0
    %330 = vmatprep.subr.mxu0 0.0
    %331 = vmatpush1.msra.mxu0 0.0
    %332 = vmatprep.subr.mxu0 0.0
    %333 = vmatpush1.msra.mxu0 0.0
    %334 = vmatprep.subr.mxu0 0.0
    %335 = vmatpush1.msra.mxu0 0.0
    %336 = vmatprep.subr.mxu0 0.0
    %337 = vmatpush1.msra.mxu0 0.0
    %338 = vmatprep.subr.mxu0 0.0
    %339 = vmatpush1.msra.mxu0 0.0
    %340 = vmatprep.subr.mxu0 0.0
    %341 = vmatpush1.msra.mxu0 0.0
    %342 = vmatprep.subr.mxu0 0.0
    %343 = vmatpush1.msra.mxu0 0.0
    %344 = vmatprep.subr.mxu0 0.0
    %345 = vmatpush1.msra.mxu0 0.0
    %346 = vmatprep.subr.mxu0 0.0
    %347 = vmatpush1.msra.mxu0 0.0
    %348 = vmatprep.subr.mxu0 0.0
    %349 = vmatpush1.msra.mxu0 0.0
    %350 = vmatprep.subr.mxu0 0.0
    %351 = vmatpush1.msra.mxu0 0.0
    %352 = vmatprep.subr.mxu0 0.0
    %353 = vmatpush1.msra.mxu0 0.0
    %354 = vmatprep.mubr.f32.mxu0 0.0
    %355 = vmatmul.mubr.f32.gmra.mrb[0].mxu0 %v217
    %v356 = vpop.f32.mrb[0].mxu0
    %v357 = vadd.f32 %v206, %v356
    %v358 = vpop.f32.mrb[0].mxu0
    %v359 = vadd.f32 %v210, %v358
    %360 = vdwg.mxu0
    %361 = vst [vmem:[#allocation10] sm:$0xff] %v286
    %362 = vst [vmem:[#allocation10 + $0x8] sm:$0xff] %v288
    %363 = vst [vmem:[#allocation10 + $0x10] sm:$0xff] %v357
    %364 = vst [vmem:[#allocation10 + $0x18] sm:$0xff] %v359
    %v365 = vld [vmem:[%s5] sm:$0xff]
    %v366 = vld [vmem:[%s6] sm:$0x1]
    %v368 = vlaneseq
    %v369 = vshrl.u32 %v368, 7
    %v370 = vsub.s32 0, %v369
    %v371 = vrot.slane %v366, %v370
    %373 = vmatprep.subr.mxu0 0.0
    %374 = vmatpush1.msra.mxu0 %v365
    %375 = vmatprep.subr.mxu0 0.0
    %376 = vmatpush1.msra.mxu0 0.0
    %377 = vmatprep.subr.mxu0 0.0
    %378 = vmatpush1.msra.mxu0 0.0
    %379 = vmatprep.subr.mxu0 0.0
    %380 = vmatpush1.msra.mxu0 0.0
    %381 = vmatprep.subr.mxu0 0.0
    %382 = vmatpush1.msra.mxu0 0.0
    %383 = vmatprep.subr.mxu0 0.0
    %384 = vmatpush1.msra.mxu0 0.0
    %385 = vmatprep.subr.mxu0 0.0
    %386 = vmatpush1.msra.mxu0 0.0
    %387 = vmatprep.subr.mxu0 0.0
    %388 = vmatpush1.msra.mxu0 0.0
    %389 = vmatprep.subr.mxu0 0.0
    %390 = vmatpush1.msra.mxu0 0.0
    %391 = vmatprep.subr.mxu0 0.0
    %392 = vmatpush1.msra.mxu0 0.0
    %393 = vmatprep.subr.mxu0 0.0
    %394 = vmatpush1.msra.mxu0 0.0
    %395 = vmatprep.subr.mxu0 0.0
    %396 = vmatpush1.msra.mxu0 0.0
    %397 = vmatprep.subr.mxu0 0.0
    %398 = vmatpush1.msra.mxu0 0.0
    %399 = vmatprep.subr.mxu0 0.0
    %400 = vmatpush1.msra.mxu0 0.0
    %401 = vmatprep.subr.mxu0 0.0
    %402 = vmatpush1.msra.mxu0 0.0
    %403 = vmatprep.subr.mxu0 0.0
    %404 = vmatpush1.msra.mxu0 0.0
    %405 = vmatprep.subr.mxu0 0.0
    %406 = vmatpush1.msra.mxu0 0.0
    %407 = vmatprep.subr.mxu0 0.0
    %408 = vmatpush1.msra.mxu0 0.0
    %409 = vmatprep.subr.mxu0 0.0
    %410 = vmatpush1.msra.mxu0 0.0
    %411 = vmatprep.subr.mxu0 0.0
    %412 = vmatpush1.msra.mxu0 0.0
    %413 = vmatprep.subr.mxu0 0.0
    %414 = vmatpush1.msra.mxu0 0.0
    %415 = vmatprep.subr.mxu0 0.0
    %416 = vmatpush1.msra.mxu0 0.0
    %417 = vmatprep.subr.mxu0 0.0
    %418 = vmatpush1.msra.mxu0 0.0
    %419 = vmatprep.subr.mxu0 0.0
    %420 = vmatpush1.msra.mxu0 0.0
    %421 = vmatprep.subr.mxu0 0.0
    %422 = vmatpush1.msra.mxu0 0.0
    %423 = vmatprep.subr.mxu0 0.0
    %424 = vmatpush1.msra.mxu0 0.0
    %425 = vmatprep.subr.mxu0 0.0
    %426 = vmatpush1.msra.mxu0 0.0
    %427 = vmatprep.subr.mxu0 0.0
    %428 = vmatpush1.msra.mxu0 0.0
    %429 = vmatprep.subr.mxu0 0.0
    %430 = vmatpush1.msra.mxu0 0.0
    %431 = vmatprep.subr.mxu0 0.0
    %432 = vmatpush1.msra.mxu0 0.0
    %433 = vmatprep.subr.mxu0 0.0
    %434 = vmatpush1.msra.mxu0 0.0
    %435 = vmatprep.subr.mxu0 0.0
    %436 = vmatpush1.msra.mxu0 0.0
    %437 = vmatprep.mubr.f32.mxu0 0.0
    %438 = vmatmul.mubr.f32.gmra.mrb[0].mxu0 %v98
    %v439 = vpop.f32.mrb[0].mxu0
    %v440 = vadd.f32 %v371, %v439
    %v441 = vpop.f32.mrb[0].mxu0
    %442 = vdwg.mxu0
    %v443 = vxor.u32 %v440, 2147483648
    %v444 = vmul.f32 %v443, 1.442695
    %v445 = vpow.pop %v444
    %v446 = vadd.f32 %v445, 1.0
    %v447 = vrcp.pop %v446
    %v448 = vmul.f32 1.0, %v447
    %v449 = vmul.f32 %v440, %v448
    %v450 = vld [vmem:[#allocation8] sm:$0xff]
    %v451 = vld [vmem:[#allocation8 + $0x8] sm:$0xff]
    %v452 = vld [vmem:[#allocation8 + $0x10] sm:$0xff]
    %v453 = vld [vmem:[#allocation8 + $0x18] sm:$0xff]
    %v454 = vld [vmem:[#allocation8 + $0x20] sm:$0xff]
    %v455 = vld [vmem:[#allocation8 + $0x28] sm:$0xff]
    %v456 = vld [vmem:[#allocation8 + $0x30] sm:$0xff]
    %v457 = vld [vmem:[#allocation8 + $0x38] sm:$0xff]
    %v458 = vld [vmem:[#allocation8 + $0x40] sm:$0xff]
    %v459 = vld [vmem:[#allocation8 + $0x48] sm:$0xff]
    %v460 = vld [vmem:[#allocation8 + $0x50] sm:$0xff]
    %v461 = vld [vmem:[#allocation8 + $0x58] sm:$0xff]
    %v462 = vld [vmem:[#allocation8 + $0x60] sm:$0xff]
    %v463 = vld [vmem:[#allocation8 + $0x68] sm:$0xff]
    %v464 = vld [vmem:[#allocation8 + $0x70] sm:$0xff]
    %v465 = vld [vmem:[#allocation8 + $0x78] sm:$0xff]
    %v466 = vld [vmem:[%s8] sm:$0xf]
    %v468 = vlaneseq
    %v469 = vshrl.u32 %v468, 7
    %v470 = vsub.s32 0, %v469
    %v471 = vrot.slane %v466, %v470
    %v472 = vlaneseq
    %v473 = vshrl.u32 %v472, 7
    %v474 = vsub.s32 1, %v473
    %v475 = vrot.slane %v466, %v474
    %v476 = vlaneseq
    %v477 = vshrl.u32 %v476, 7
    %v478 = vsub.s32 2, %v477
    %v479 = vrot.slane %v466, %v478
    %v480 = vlaneseq
    %v481 = vshrl.u32 %v480, 7
    %v482 = vsub.s32 3, %v481
    %v483 = vrot.slane %v466, %v482
    %v489 = vsel %vm215, %v449, 0
    %491 = vmatprep.subr.mxu0 %v451
    %492 = vmatpush1.msra.mxu0 %v450
    %493 = vmatprep.subr.mxu0 %v455
    %494 = vmatpush1.msra.mxu0 %v454
    %495 = vmatprep.subr.mxu0 %v459
    %496 = vmatpush1.msra.mxu0 %v458
    %497 = vmatprep.subr.mxu0 %v463
    %498 = vmatpush1.msra.mxu0 %v462
    %499 = vmatprep.subr.mxu0 0.0
    %500 = vmatpush1.msra.mxu0 0.0
    %501 = vmatprep.subr.mxu0 0.0
    %502 = vmatpush1.msra.mxu0 0.0
    %503 = vmatprep.subr.mxu0 0.0
    %504 = vmatpush1.msra.mxu0 0.0
    %505 = vmatprep.subr.mxu0 0.0
    %506 = vmatpush1.msra.mxu0 0.0
    %507 = vmatprep.subr.mxu0 0.0
    %508 = vmatpush1.msra.mxu0 0.0
    %509 = vmatprep.subr.mxu0 0.0
    %510 = vmatpush1.msra.mxu0 0.0
    %511 = vmatprep.subr.mxu0 0.0
    %512 = vmatpush1.msra.mxu0 0.0
    %513 = vmatprep.subr.mxu0 0.0
    %514 = vmatpush1.msra.mxu0 0.0
    %515 = vmatprep.subr.mxu0 0.0
    %516 = vmatpush1.msra.mxu0 0.0
    %517 = vmatprep.subr.mxu0 0.0
    %518 = vmatpush1.msra.mxu0 0.0
    %519 = vmatprep.subr.mxu0 0.0
    %520 = vmatpush1.msra.mxu0 0.0
    %521 = vmatprep.subr.mxu0 0.0
    %522 = vmatpush1.msra.mxu0 0.0
    %523 = vmatprep.subr.mxu0 0.0
    %524 = vmatpush1.msra.mxu0 0.0
    %525 = vmatprep.subr.mxu0 0.0
    %526 = vmatpush1.msra.mxu0 0.0
    %527 = vmatprep.subr.mxu0 0.0
    %528 = vmatpush1.msra.mxu0 0.0
    %529 = vmatprep.subr.mxu0 0.0
    %530 = vmatpush1.msra.mxu0 0.0
    %531 = vmatprep.subr.mxu0 0.0
    %532 = vmatpush1.msra.mxu0 0.0
    %533 = vmatprep.subr.mxu0 0.0
    %534 = vmatpush1.msra.mxu0 0.0
    %535 = vmatprep.subr.mxu0 0.0
    %536 = vmatpush1.msra.mxu0 0.0
    %537 = vmatprep.subr.mxu0 0.0
    %538 = vmatpush1.msra.mxu0 0.0
    %539 = vmatprep.subr.mxu0 0.0
    %540 = vmatpush1.msra.mxu0 0.0
    %541 = vmatprep.subr.mxu0 0.0
    %542 = vmatpush1.msra.mxu0 0.0
    %543 = vmatprep.subr.mxu0 0.0
    %544 = vmatpush1.msra.mxu0 0.0
    %545 = vmatprep.subr.mxu0 0.0
    %546 = vmatpush1.msra.mxu0 0.0
    %547 = vmatprep.subr.mxu0 0.0
    %548 = vmatpush1.msra.mxu0 0.0
    %549 = vmatprep.subr.mxu0 0.0
    %550 = vmatpush1.msra.mxu0 0.0
    %551 = vmatprep.subr.mxu0 0.0
    %552 = vmatpush1.msra.mxu0 0.0
    %553 = vmatprep.subr.mxu0 0.0
    %554 = vmatpush1.msra.mxu0 0.0
    %555 = vmatprep.mubr.f32.mxu0 0.0
    %556 = vmatmul.mubr.f32.gmra.mrb[0].mxu0 %v489
    %v557 = vpop.f32.mrb[0].mxu0
    %v558 = vadd.f32 %v471, %v557
    %v559 = vpop.f32.mrb[0].mxu0
    %v560 = vadd.f32 %v475, %v559
    %561 = vdwg.mxu0
    %562 = vmatprep.subr.mxu0 %v453
    %563 = vmatpush1.msra.mxu0 %v452
    %564 = vmatprep.subr.mxu0 %v457
    %565 = vmatpush1.msra.mxu0 %v456
    %566 = vmatprep.subr.mxu0 %v461
    %567 = vmatpush1.msra.mxu0 %v460
    %568 = vmatprep.subr.mxu0 %v465
    %569 = vmatpush1.msra.mxu0 %v464
    %570 = vmatprep.subr.mxu0 0.0
    %571 = vmatpush1.msra.mxu0 0.0
    %572 = vmatprep.subr.mxu0 0.0
    %573 = vmatpush1.msra.mxu0 0.0
    %574 = vmatprep.subr.mxu0 0.0
    %575 = vmatpush1.msra.mxu0 0.0
    %576 = vmatprep.subr.mxu0 0.0
    %577 = vmatpush1.msra.mxu0 0.0
    %578 = vmatprep.subr.mxu0 0.0
    %579 = vmatpush1.msra.mxu0 0.0
    %580 = vmatprep.subr.mxu0 0.0
    %581 = vmatpush1.msra.mxu0 0.0
    %582 = vmatprep.subr.mxu0 0.0
    %583 = vmatpush1.msra.mxu0 0.0
    %584 = vmatprep.subr.mxu0 0.0
    %585 = vmatpush1.msra.mxu0 0.0
    %586 = vmatprep.subr.mxu0 0.0
    %587 = vmatpush1.msra.mxu0 0.0
    %588 = vmatprep.subr.mxu0 0.0
    %589 = vmatpush1.msra.mxu0 0.0
    %590 = vmatprep.subr.mxu0 0.0
    %591 = vmatpush1.msra.mxu0 0.0
    %592 = vmatprep.subr.mxu0 0.0
    %593 = vmatpush1.msra.mxu0 0.0
    %594 = vmatprep.subr.mxu0 0.0
    %595 = vmatpush1.msra.mxu0 0.0
    %596 = vmatprep.subr.mxu0 0.0
    %597 = vmatpush1.msra.mxu0 0.0
    %598 = vmatprep.subr.mxu0 0.0
    %599 = vmatpush1.msra.mxu0 0.0
    %600 = vmatprep.subr.mxu0 0.0
    %601 = vmatpush1.msra.mxu0 0.0
    %602 = vmatprep.subr.mxu0 0.0
    %603 = vmatpush1.msra.mxu0 0.0
    %604 = vmatprep.subr.mxu0 0.0
    %605 = vmatpush1.msra.mxu0 0.0
    %606 = vmatprep.subr.mxu0 0.0
    %607 = vmatpush1.msra.mxu0 0.0
    %608 = vmatprep.subr.mxu0 0.0
    %609 = vmatpush1.msra.mxu0 0.0
    %610 = vmatprep.subr.mxu0 0.0
    %611 = vmatpush1.msra.mxu0 0.0
    %612 = vmatprep.subr.mxu0 0.0
    %613 = vmatpush1.msra.mxu0 0.0
    %614 = vmatprep.subr.mxu0 0.0
    %615 = vmatpush1.msra.mxu0 0.0
    %616 = vmatprep.subr.mxu0 0.0
    %617 = vmatpush1.msra.mxu0 0.0
    %618 = vmatprep.subr.mxu0 0.0
    %619 = vmatpush1.msra.mxu0 0.0
    %620 = vmatprep.subr.mxu0 0.0
    %621 = vmatpush1.msra.mxu0 0.0
    %622 = vmatprep.subr.mxu0 0.0
    %623 = vmatpush1.msra.mxu0 0.0
    %624 = vmatprep.subr.mxu0 0.0
    %625 = vmatpush1.msra.mxu0 0.0
    %626 = vmatprep.mubr.f32.mxu0 0.0
    %627 = vmatmul.mubr.f32.gmra.mrb[0].mxu0 %v489
    %v628 = vpop.f32.mrb[0].mxu0
    %v629 = vadd.f32 %v479, %v628
    %v630 = vpop.f32.mrb[0].mxu0
    %v631 = vadd.f32 %v483, %v630
    %632 = vdwg.mxu0
    %633 = vst [vmem:[#allocation11] sm:$0xff] %v558
    %634 = vst [vmem:[#allocation11 + $0x8] sm:$0xff] %v560
    %635 = vst [vmem:[#allocation11 + $0x10] sm:$0xff] %v629
    %636 = vst [vmem:[#allocation11 + $0x18] sm:$0xff] %v631
    // Predicated region
    $region54: #{tpu_custom_call.1} parent=1 // pred_check
      _
    $region55: #{tpu_custom_call.1} parent=1 // pred_check_branch
      %638 = sbr.rel (0) target = $region57
    $region56: #{tpu_custom_call.1} parent=1 // pred_region
      %s640 = ssub.s32 512, 512
      %641 = vsyncadd [#allocation4], %s640
      %s643 = sshll.u32 [#allocation10], 4
      %s644 = int_to_ptr.vmem [resolvable:$true] %s643
      %646 = dma.vmem_to_hbm [thread:$0]  %s644, 512, %s9, [#allocation4]
    $region57: #{tpu_custom_call.1} parent=1 // pred_fallthru
      _
    // Predicated region
    $region58: #{tpu_custom_call.1} parent=1 // pred_check
      _
    $region59: #{tpu_custom_call.1} parent=1 // pred_check_branch
      %648 = sbr.rel (0) target = $region61
    $region60: #{tpu_custom_call.1} parent=1 // pred_region
      %s650 = ssub.s32 512, 512
      %651 = vsyncadd [#allocation12], %s650
      %s653 = sshll.u32 [#allocation11], 4
      %s654 = int_to_ptr.vmem [resolvable:$true] %s653
      %656 = dma.vmem_to_hbm [thread:$0]  %s654, 512, %s10, [#allocation12]
    $region61: #{tpu_custom_call.1} parent=1 // pred_fallthru
      _
    // Predicated region
    $region62: #{tpu_custom_call.1} parent=1 // pred_check
      _
    $region63: #{tpu_custom_call.1} parent=1 // pred_check_branch
      %658 = sbr.rel (0) target = $region65
    $region64: #{tpu_custom_call.1} parent=1 // pred_region
      %659 = dma.done [#allocation4], 512
    $region65: #{tpu_custom_call.1} parent=1 // pred_fallthru
      _
    // Predicated region
    $region66: #{tpu_custom_call.1} parent=1 // pred_check
      _
    $region67: #{tpu_custom_call.1} parent=1 // pred_check_branch
      %661 = sbr.rel (0) target = $region69
    $region68: #{tpu_custom_call.1} parent=1 // pred_region
      %662 = dma.done [#allocation12], 512
    $region69: #{tpu_custom_call.1} parent=1 // pred_fallthru
      _
    %663 = vsyncpa [#allocation3], 1
    %664 = vsyncpa [#allocation6], 1
    %665 = vsyncpa [#allocation9], 1
    %666 = vsyncpa [#allocation4], 1
    %667 = vsyncpa [#allocation12], 1

</llo_original>
